<compile_context>
chip_gen: v7x
topology: tpu7x:2x2x1
jax: 0.10.0
libtpu: 0.0.40
codegen_flags: <defaults>
</compile_context>

<pallas_src>
import jax
import jax.numpy as jnp
from jax.experimental import pallas as pl
from jax.experimental.pallas import tpu as pltpu

D_EMB = 512
H1 = 256
H2 = 128
NUM_CLASSES = 4
NC_PAD = 128          # lane-dense padded output width


def _round_up(x, m):
    return (x + m - 1) // m * m


def _choose_batch_tile(B, tb=None):
    """Mem-bound kernel: size the batch tile for ~2 MiB of bf16 embedding
    bytes per grid step (amortizes per-step pipeline overhead).  MXU M-fill
    (128/256) is irrelevant here, so no per-generation special-casing."""
    if tb is None:
        tb = 1024
    tb = max(8, _round_up(min(tb, _round_up(B, 8)), 8))
    # Keep the grid >= 2 steps when the batch allows so the "parallel" batch
    # axis can shard across v7x's two TensorCores.
    if B >= 16 and pl.cdiv(B, tb) < 2:
        tb = max(8, _round_up(pl.cdiv(B, 2), 8))
    return tb


def _vmem_limit_bytes(tb, n_views):
    """Explicit scoped-VMEM budget (double-buffered blocks + resident weights),
    so large user tiles don't silently fail on v7x (64 MiB physical)."""
    emb_blk = tb * n_views * D_EMB * 2          # bf16
    vw_blk = tb * n_views * 4                   # f32
    out_blk = tb * NC_PAD * 2                   # bf16
    wts = (D_EMB * H1 + H1 * H2 + H2 * NC_PAD) * 2 + (H1 + H2 + NC_PAD) * 4
    est = 2 * (emb_blk + vw_blk + out_blk + wts) + (1 << 20)
    return int(min(max(2 * est, 32 << 20), 48 << 20))


# ----------------------------------------------------------------------------
# Pallas kernel: weighted-average over views + ClassificationHead MLP
# ----------------------------------------------------------------------------
def as_classifier_kernel(emb_ref, vw_ref,
                         w1_ref, b1_ref, w2_ref, b2_ref, w3_ref, b3_ref,
                         out_ref):
    n_views = emb_ref.shape[0]
    vw = vw_ref[...]                                       # (tb, V) f32

    # Denominator and per-view scales via lane slices (unrolled, no cross-lane
    # reduce); exact divide for parity with the reference (review note).
    cols = [vw[:, v:v + 1] for v in range(n_views)]        # V x (tb, 1)
    den = cols[0]
    for v in range(1, n_views):
        den = den + cols[v]
    inv_den = 1.0 / den                                    # (tb, 1), tiny

    # weighted_avg = sum_v emb[v] * (w_v / sum_w):
    # unrolled sublane-dense (tb, 512) VPU multiply-adds; the bf16 embeddings
    # are upcast to f32 on the VPU as part of the multiply.
    wavg = emb_ref[0].astype(jnp.float32) * (cols[0] * inv_den)
    for v in range(1, n_views):
        wavg = wavg + emb_ref[v].astype(jnp.float32) * (cols[v] * inv_den)

    # ClassificationHead: Linear(512,256) -> ReLU -> Linear(256,128) -> ReLU
    #                     -> Linear(128, 4 [padded to 128])
    # bf16 operands into the MXU, f32 accumulation; bias/ReLU in f32 on VPU.
    h = jnp.dot(wavg.astype(jnp.bfloat16), w1_ref[...],
                preferred_element_type=jnp.float32)
    h = jnp.maximum(h + b1_ref[...], 0.0)                  # (tb, 256)
    h = jnp.dot(h.astype(jnp.bfloat16), w2_ref[...],
                preferred_element_type=jnp.float32)
    h = jnp.maximum(h + b2_ref[...], 0.0)                  # (tb, 128)
    logits = jnp.dot(h.astype(jnp.bfloat16), w3_ref[...],
                     preferred_element_type=jnp.float32)
    out_ref[...] = (logits + b3_ref[...]).astype(out_ref.dtype)  # bf16 store


def as_classifier_head(emb_vbd, view_weights, params, *, tb=None):
    """Weighted view average + ClassificationHead MLP.

    emb_vbd:      (V, B, 512) encoder embeddings, view-major.  Should already
                  be bf16 (cast fused into the encoder's last op / producer)
                  to halve the dominant HBM stream.
    view_weights: (B, V) f32
    returns:      (B, 4) f32 logits
    """
    V, B, D = emb_vbd.shape
    assert D == D_EMB and view_weights.shape == (B, V)
    if emb_vbd.dtype != jnp.bfloat16:
        # Fallback only: costs one extra pass over the dominant stream if the
        # producer did not already emit bf16.
        emb_vbd = emb_vbd.astype(jnp.bfloat16)
    view_weights = view_weights.astype(jnp.float32)

    w1, b1, w2, b2, w3, b3 = params
    # Lane-dense final layer: zero-pad 4 -> 128 output columns.
    w3p = jnp.zeros((H2, NC_PAD), w3.dtype).at[:, :NUM_CLASSES].set(w3)
    b3p = jnp.zeros((1, NC_PAD), jnp.float32).at[:, :NUM_CLASSES].set(b3)

    # bf16 weights (native MXU path, halves weight bytes); biases f32 (tiny).
    w1b = w1.astype(jnp.bfloat16)
    w2b = w2.astype(jnp.bfloat16)
    w3b = w3p.astype(jnp.bfloat16)
    b1f = b1.astype(jnp.float32)
    b2f = b2.astype(jnp.float32)

    tb = _choose_batch_tile(B, tb)
    # Ragged last tile handled by Pallas partial edge blocks -> no jnp.pad
    # (which would re-materialize the whole embedding stream in HBM).
    grid = (pl.cdiv(B, tb),)

    flops = 2 * B * (V * D + D * H1 + H1 * H2 + H2 * NC_PAD)
    bytes_accessed = (B * V * D * 2 + B * V * 4
                      + (w1b.size + w2b.size + w3b.size) * 2
                      + (b1f.size + b2f.size + b3p.size) * 4
                      + B * NC_PAD * 2)

    out = pl.pallas_call(
        as_classifier_kernel,
        out_shape=jax.ShapeDtypeStruct((B, NC_PAD), jnp.bfloat16),
        grid_spec=pltpu.PrefetchScalarGridSpec(
            num_scalar_prefetch=0,
            grid=grid,
            in_specs=[
                # Batch-tiled, pipelined inputs.  View-major embeddings so the
                # view reduce is sublane-dense.
                pl.BlockSpec((V, tb, D), lambda i: (0, i, 0)),
                pl.BlockSpec((tb, V), lambda i: (i, 0)),
                # VMEM-resident weights/biases (same block every grid step).
                # They are small (~0.4 MiB), so default double-buffering fits
                # comfortably inside the VMEM budget at these tile sizes.
                pl.BlockSpec((D, H1), lambda i: (0, 0)),
                pl.BlockSpec((1, H1), lambda i: (0, 0)),
                pl.BlockSpec((H1, H2), lambda i: (0, 0)),
                pl.BlockSpec((1, H2), lambda i: (0, 0)),
                pl.BlockSpec((H2, NC_PAD), lambda i: (0, 0)),
                pl.BlockSpec((1, NC_PAD), lambda i: (0, 0)),
            ],
            out_specs=pl.BlockSpec((tb, NC_PAD), lambda i: (i, 0)),
        ),
        compiler_params=pltpu.CompilerParams(
            dimension_semantics=("parallel",),
            vmem_limit_bytes=_vmem_limit_bytes(tb, V)),
        cost_estimate=pl.CostEstimate(
            flops=flops, transcendentals=B, bytes_accessed=bytes_accessed),
    )(emb_vbd, view_weights, w1b, b1f, w2b, b2f, w3b, b3p)

    return out[:, :NUM_CLASSES].astype(jnp.float32)


# ----------------------------------------------------------------------------
# Deterministic parameter init (shapes from ClassificationHead.__init__),
# weights stored transposed vs torch, i.e. (in, out).
# ----------------------------------------------------------------------------
def init_head_params(key):
    k1, k2, k3 = jax.random.split(key, 3)

    def lin(k, fan_in, fan_out):
        bound = 1.0 / jnp.sqrt(fan_in)
        kw, kb = jax.random.split(k)
        w = jax.random.uniform(kw, (fan_in, fan_out), jnp.float32, -bound, bound)
        b = jax.random.uniform(kb, (1, fan_out), jnp.float32, -bound, bound)
        return w, b

    w1, b1 = lin(k1, D_EMB, H1)
    w2, b2 = lin(k2, H1, H2)
    w3, b3 = lin(k3, H2, NUM_CLASSES)
    return (w1, b1, w2, b2, w3, b3)


if __name__ == "__main__":
    key = jax.random.PRNGKey(0)
    k_vid, k_proj, k_params = jax.random.split(key, 3)

    # Small shapes consistent with _forward_paired_views:
    # stacked_tensors: (batch, num_videos, C, T, H, W)
    B, V, C, T, H, W = 2, 2, 3, 4, 16, 16
    videos = jax.random.normal(k_vid, (B, V, C, T, H, W), jnp.float32)
    feat_dim = C * T * H * W
    proj = jax.random.normal(k_proj, (feat_dim, D_EMB), jnp.float32) / jnp.sqrt(feat_dim)

    # view_weights = {'psax': 1.0, 'plax': 1.5}; each study has (psax, plax).
    view_weight_map = {"psax": 1.0, "plax": 1.5}
    views_batch = [("psax", "plax")] * B
    vweights = jnp.array(
        [[view_weight_map[v] for v in views] for views in views_batch],
        dtype=jnp.float32)                                 # (B, V)

    params = init_head_params(k_params)

    @jax.jit
    def forward(videos, vweights, params):
        # Encoder stand-in (plain JAX glue).
        # TODO(synk): real module runs a checkpoint-loaded torchvision
        # MViT_v2_s video encoder here; replaced by a deterministic linear
        # projection to 512-d with the same output shape.
        emb = (videos.reshape(B * V, feat_dim) @ proj).reshape(B, V, D_EMB)
        # Producer-fused prep: view-major (V, B, D) bf16 embeddings so the
        # kernel streams half the bytes and reduces views sublane-dense.
        emb_vbd = jnp.transpose(emb, (1, 0, 2)).astype(jnp.bfloat16)
        return as_classifier_head(emb_vbd, vweights, params)

    logits = forward(videos, vweights, params)
    jax.block_until_ready(logits)

    # Pure-JAX reference of the kernel's math (bf16 embeddings / bf16 matmul
    # operands, f32 accumulation).
    w1, b1, w2, b2, w3, b3 = params
    emb = (videos.reshape(B * V, feat_dim) @ proj).reshape(B, V, D_EMB)
    emb_bf = emb.astype(jnp.bfloat16).astype(jnp.float32)
    wavg = (jnp.sum(emb_bf * vweights[:, :, None], axis=1)
            / jnp.sum(vweights, axis=1, keepdims=True))
    ref = jnp.dot(wavg.astype(jnp.bfloat16), w1.astype(jnp.bfloat16),
                  preferred_element_type=jnp.float32) + b1
    ref = jnp.maximum(ref, 0.0)
    ref = jnp.dot(ref.astype(jnp.bfloat16), w2.astype(jnp.bfloat16),
                  preferred_element_type=jnp.float32) + b2
    ref = jnp.maximum(ref, 0.0)
    ref = jnp.dot(ref.astype(jnp.bfloat16), w3.astype(jnp.bfloat16),
                  preferred_element_type=jnp.float32) + b3

    assert logits.shape == (B, NUM_CLASSES)
    assert bool(jnp.all(jnp.isfinite(logits)))
    assert jnp.allclose(logits, ref, atol=3e-2, rtol=3e-2)

    print("KERNEL_OK")
</pallas_src>

<mosaic_0001>
module attributes {stable_mosaic.version = 11 : i64} {
  func.func @as_classifier_kernel(%arg0: i32, %arg1: memref<2x8x512xbf16, #tpu.memory_space<vmem>>, %arg2: memref<8x2xf32, #tpu.memory_space<vmem>>, %arg3: memref<512x256xbf16, #tpu.memory_space<vmem>>, %arg4: memref<1x256xf32, #tpu.memory_space<vmem>>, %arg5: memref<256x128xbf16, #tpu.memory_space<vmem>>, %arg6: memref<1x128xf32, #tpu.memory_space<vmem>>, %arg7: memref<128x128xbf16, #tpu.memory_space<vmem>>, %arg8: memref<1x128xf32, #tpu.memory_space<vmem>>, %arg9: memref<8x128xbf16, #tpu.memory_space<vmem>>) attributes {dimension_semantics = [#tpu.dimension_semantics<parallel>], iteration_bounds = array<i64: 1>, scalar_prefetch = 0 : i64, scratch_operands = 0 : i64, tpu.core_type = #tpu.core_type<tc>, window_params = [{transform_indices = @transform_0, window_bounds = array<i64: 2, 8, 512>}, {transform_indices = @transform_1, window_bounds = array<i64: 8, 2>}, {pipeline_mode = #tpu.pipeline_mode<synchronous>, transform_indices = @transform_2, window_bounds = array<i64: 512, 256>}, {pipeline_mode = #tpu.pipeline_mode<synchronous>, transform_indices = @transform_3, window_bounds = array<i64: 1, 256>}, {pipeline_mode = #tpu.pipeline_mode<synchronous>, transform_indices = @transform_4, window_bounds = array<i64: 256, 128>}, {pipeline_mode = #tpu.pipeline_mode<synchronous>, transform_indices = @transform_5, window_bounds = array<i64: 1, 128>}, {pipeline_mode = #tpu.pipeline_mode<synchronous>, transform_indices = @transform_6, window_bounds = array<i64: 128, 128>}, {pipeline_mode = #tpu.pipeline_mode<synchronous>, transform_indices = @transform_7, window_bounds = array<i64: 1, 128>}, {transform_indices = @transform_8, window_bounds = array<i64: 8, 128>}]} {
    %c0 = arith.constant 0 : index
    %c0_0 = arith.constant 0 : index
    %0 = vector.load %arg2[%c0, %c0_0] : memref<8x2xf32, #tpu.memory_space<vmem>>, vector<8x2xf32>
    %1 = vector.extract_strided_slice %0 {offsets = [0, 0], sizes = [8, 1], strides = [1, 1]} : vector<8x2xf32> to vector<8x1xf32>
    %2 = vector.extract_strided_slice %0 {offsets = [0, 1], sizes = [8, 1], strides = [1, 1]} : vector<8x2xf32> to vector<8x1xf32>
    %3 = arith.addf %1, %2 : vector<8x1xf32>
    %cst = arith.constant 1.000000e+00 : f32
    %4 = vector.broadcast %cst : f32 to vector<8x1xf32>
    %5 = arith.divf %4, %3 : vector<8x1xf32>
    %c0_1 = arith.constant 0 : index
    %c0_2 = arith.constant 0 : index
    %c0_3 = arith.constant 0 : index
    %6 = vector.load %arg1[%c0_1, %c0_2, %c0_3] : memref<2x8x512xbf16, #tpu.memory_space<vmem>>, vector<1x8x512xbf16>
    %7 = vector.shape_cast %6 : vector<1x8x512xbf16> to vector<8x512xbf16>
    %8 = arith.extf %7 : vector<8x512xbf16> to vector<8x512xf32>
    %9 = arith.mulf %1, %5 : vector<8x1xf32>
    %10 = vector.broadcast %9 : vector<8x1xf32> to vector<8x512xf32>
    %11 = arith.mulf %8, %10 : vector<8x512xf32>
    %c1 = arith.constant 1 : index
    %c0_4 = arith.constant 0 : index
    %c0_5 = arith.constant 0 : index
    %12 = vector.load %arg1[%c1, %c0_4, %c0_5] : memref<2x8x512xbf16, #tpu.memory_space<vmem>>, vector<1x8x512xbf16>
    %13 = vector.shape_cast %12 : vector<1x8x512xbf16> to vector<8x512xbf16>
    %14 = arith.extf %13 : vector<8x512xbf16> to vector<8x512xf32>
    %15 = arith.mulf %2, %5 : vector<8x1xf32>
    %16 = vector.broadcast %15 : vector<8x1xf32> to vector<8x512xf32>
    %17 = arith.mulf %14, %16 : vector<8x512xf32>
    %18 = arith.addf %11, %17 : vector<8x512xf32>
    %19 = arith.truncf %18 : vector<8x512xf32> to vector<8x512xbf16>
    %c0_6 = arith.constant 0 : index
    %c0_7 = arith.constant 0 : index
    %20 = vector.load %arg3[%c0_6, %c0_7] : memref<512x256xbf16, #tpu.memory_space<vmem>>, vector<512x256xbf16>
    %cst_8 = arith.constant dense<0.000000e+00> : vector<8x256xf32>
    %21 = tpu.matmul %19, %20, %cst_8 {dimension_numbers = #tpu.dot_dimension_numbers<[1], [0], [0], [1], [0, 0, 1, 1], [], []>} : vector<8x512xbf16>, vector<512x256xbf16>, vector<8x256xf32> -> vector<8x256xf32>
    %c0_9 = arith.constant 0 : index
    %c0_10 = arith.constant 0 : index
    %22 = vector.load %arg4[%c0_9, %c0_10] : memref<1x256xf32, #tpu.memory_space<vmem>>, vector<1x256xf32>
    %23 = vector.broadcast %22 : vector<1x256xf32> to vector<8x256xf32>
    %24 = arith.addf %21, %23 : vector<8x256xf32>
    %cst_11 = arith.constant 0.000000e+00 : f32
    %25 = vector.broadcast %cst_11 : f32 to vector<8x256xf32>
    %26 = arith.maximumf %24, %25 : vector<8x256xf32>
    %27 = arith.truncf %26 : vector<8x256xf32> to vector<8x256xbf16>
    %c0_12 = arith.constant 0 : index
    %c0_13 = arith.constant 0 : index
    %28 = vector.load %arg5[%c0_12, %c0_13] : memref<256x128xbf16, #tpu.memory_space<vmem>>, vector<256x128xbf16>
    %cst_14 = arith.constant dense<0.000000e+00> : vector<8x128xf32>
    %29 = tpu.matmul %27, %28, %cst_14 {dimension_numbers = #tpu.dot_dimension_numbers<[1], [0], [0], [1], [0, 0, 1, 1], [], []>} : vector<8x256xbf16>, vector<256x128xbf16>, vector<8x128xf32> -> vector<8x128xf32>
    %c0_15 = arith.constant 0 : index
    %c0_16 = arith.constant 0 : index
    %30 = vector.load %arg6[%c0_15, %c0_16] : memref<1x128xf32, #tpu.memory_space<vmem>>, vector<1x128xf32>
    %31 = vector.broadcast %30 : vector<1x128xf32> to vector<8x128xf32>
    %32 = arith.addf %29, %31 : vector<8x128xf32>
    %cst_17 = arith.constant 0.000000e+00 : f32
    %33 = vector.broadcast %cst_17 : f32 to vector<8x128xf32>
    %34 = arith.maximumf %32, %33 : vector<8x128xf32>
    %35 = arith.truncf %34 : vector<8x128xf32> to vector<8x128xbf16>
    %c0_18 = arith.constant 0 : index
    %c0_19 = arith.constant 0 : index
    %36 = vector.load %arg7[%c0_18, %c0_19] : memref<128x128xbf16, #tpu.memory_space<vmem>>, vector<128x128xbf16>
    %cst_20 = arith.constant dense<0.000000e+00> : vector<8x128xf32>
    %37 = tpu.matmul %35, %36, %cst_20 {dimension_numbers = #tpu.dot_dimension_numbers<[1], [0], [0], [1], [0, 0, 1, 1], [], []>} : vector<8x128xbf16>, vector<128x128xbf16>, vector<8x128xf32> -> vector<8x128xf32>
    %c0_21 = arith.constant 0 : index
    %c0_22 = arith.constant 0 : index
    %38 = vector.load %arg8[%c0_21, %c0_22] : memref<1x128xf32, #tpu.memory_space<vmem>>, vector<1x128xf32>
    %39 = vector.broadcast %38 : vector<1x128xf32> to vector<8x128xf32>
    %40 = arith.addf %37, %39 : vector<8x128xf32>
    %41 = arith.truncf %40 : vector<8x128xf32> to vector<8x128xbf16>
    %c0_23 = arith.constant 0 : index
    %c0_24 = arith.constant 0 : index
    %42 = vector.load %arg9[%c0_23, %c0_24] : memref<8x128xbf16, #tpu.memory_space<vmem>>, vector<8x128xbf16>
    tpu.vector_store %arg9[%c0_23, %c0_24], %41 {strides = array<i32>} : memref<8x128xbf16, #tpu.memory_space<vmem>>, vector<8x128xbf16>,
    return
  }
  func.func @transform_0(%arg0: i32) -> (i32, i32, i32) {
    %c0_i32 = arith.constant 0 : i32
    %c0_i32_0 = arith.constant 0 : i32
    %c0_i32_1 = arith.constant 0 : i32
    return %c0_i32, %arg0, %c0_i32_0 : i32, i32, i32
  }
  func.func @transform_1(%arg0: i32) -> (i32, i32) {
    %c0_i32 = arith.constant 0 : i32
    %c0_i32_0 = arith.constant 0 : i32
    return %arg0, %c0_i32 : i32, i32
  }
  func.func @transform_2(%arg0: i32) -> (i32, i32) {
    %c0_i32 = arith.constant 0 : i32
    %c0_i32_0 = arith.constant 0 : i32
    %c0_i32_1 = arith.constant 0 : i32
    return %c0_i32, %c0_i32_0 : i32, i32
  }
  func.func @transform_3(%arg0: i32) -> (i32, i32) {
    %c0_i32 = arith.constant 0 : i32
    %c0_i32_0 = arith.constant 0 : i32
    %c0_i32_1 = arith.constant 0 : i32
    return %c0_i32, %c0_i32_0 : i32, i32
  }
  func.func @transform_4(%arg0: i32) -> (i32, i32) {
    %c0_i32 = arith.constant 0 : i32
    %c0_i32_0 = arith.constant 0 : i32
    %c0_i32_1 = arith.constant 0 : i32
    return %c0_i32, %c0_i32_0 : i32, i32
  }
  func.func @transform_5(%arg0: i32) -> (i32, i32) {
    %c0_i32 = arith.constant 0 : i32
    %c0_i32_0 = arith.constant 0 : i32
    %c0_i32_1 = arith.constant 0 : i32
    return %c0_i32, %c0_i32_0 : i32, i32
  }
  func.func @transform_6(%arg0: i32) -> (i32, i32) {
    %c0_i32 = arith.constant 0 : i32
    %c0_i32_0 = arith.constant 0 : i32
    %c0_i32_1 = arith.constant 0 : i32
    return %c0_i32, %c0_i32_0 : i32, i32
  }
  func.func @transform_7(%arg0: i32) -> (i32, i32) {
    %c0_i32 = arith.constant 0 : i32
    %c0_i32_0 = arith.constant 0 : i32
    %c0_i32_1 = arith.constant 0 : i32
    return %c0_i32, %c0_i32_0 : i32, i32
  }
  func.func @transform_8(%arg0: i32) -> (i32, i32) {
    %c0_i32 = arith.constant 0 : i32
    %c0_i32_0 = arith.constant 0 : i32
    return %arg0, %c0_i32 : i32, i32
  }
}

</mosaic_0001>

<llo_original>
// kernel: forward.1
$region0: #{forward.1}
  #allocation0 [shape = 'u32[]', space=smem, size = 0x4, offset = 0x4, fixed_abs, tag = 'smem constant byte address 0x4 - core index']
  #allocation1 [shape = 'u32[144,128]{1,0:T(1,128)}', space=vmem, size = 0x12000, scoped, tag = 'internal scratch']
  %s0 = inlined_call_operand.vmem [shape: bf16[2,2,512], index: 0, kind: input, shape index: {}]
  %s1 = inlined_call_operand.vmem [shape: f32[2,2], index: 1, kind: input, shape index: {}]
  %s2 = inlined_call_operand.vmem [shape: bf16[512,256], index: 2, kind: input, shape index: {}]
  %s3 = inlined_call_operand.vmem [shape: f32[1,256], index: 3, kind: input, shape index: {}]
  %s4 = inlined_call_operand.vmem [shape: bf16[256,128], index: 4, kind: input, shape index: {}]
  %s5 = inlined_call_operand.vmem [shape: f32[1,128], index: 5, kind: input, shape index: {}]
  %s6 = inlined_call_operand.vmem [shape: bf16[128,128], index: 6, kind: input, shape index: {}]
  %s7 = inlined_call_operand.vmem [shape: f32[1,128], index: 7, kind: input, shape index: {}]
  %s8 = inlined_call_operand.vmem [shape: bf16[2,128], index: 8, kind: output, shape index: {}]
  %s9 = sld [smem:[#allocation0]]
  $region113: #{forward.1} parent=0
    _
  %s11 = ssub.s32 1, %s9
  %s12 = scalar_select 0, %s11, %s9
  $region1: #{forward.1} parent=0
    #allocation2 [shape = 'u8[16384]{0}', space=vmem, size = 0x4000, scoped, tag = 'input window, operand 0, single buffered']
    #allocation3 [shape = 'u8[2048]{0}', space=vmem, size = 0x800, scoped, tag = 'output window, operand 0, single buffered']
    // Predicated region
    $region2: #{forward.1} parent=1 // pred_check
      _
    $region3: #{forward.1} parent=1 // pred_check_branch
      %14 = sbr.rel (0) target = $region5
    $region4: #{forward.1} parent=1 // pred_region
      // Predicated region
      $region6: #{forward.1} parent=4 // pred_check
        _
      $region7: #{forward.1} parent=4 // pred_check_branch
        %16 = sbr.rel (0) target = $region9
      $region8: #{forward.1} parent=4 // pred_region
        // Predicated region
        $region10: #{forward.1} parent=8 // pred_check
          _
        $region11: #{forward.1} parent=8 // pred_check_branch
          %18 = sbr.rel target = $region13
        $region12: #{forward.1} parent=8 // pred_region
          // Predicated region
          $region25: #{forward.1} parent=12 // pred_check
            _
          $region26: #{forward.1} parent=12 // pred_check_branch
            %35 = sbr.rel (0) target = $region28
          $region27: #{forward.1} parent=12 // pred_region
            loop: start=0, step=1, limit=1
            $region29: #{forward.1} parent=27 // loop_pre_header
              _
            $region30: #{forward.1} parent=27 // loop_header
              %s37 = sphi 0, %s41
              %p38 = scmp.ge.s32.totalorder %s37, 1
              %s42 = sphi %s0, %s0
              %s43 = sphi [#allocation2], [#allocation2]
            $region31: #{forward.1} parent=27 // loop_header_branch
              %40 = sbr.rel (%p38) target = $region35
            $region32: #{forward.1} parent=27 // loop_body
              _
            $region33: #{forward.1} parent=27 // loop_footer
              %s41 = sadd.s32 1, %s37
            $region34: #{forward.1} parent=27 // loop_footer_branch
              %36 = sbr.rel target = $region30
            $region35: #{forward.1} parent=27 // loop_exit
              _
            loop: start=0, step=1, limit=1
            $region36: #{forward.1} parent=27 // loop_pre_header
              _
            $region37: #{forward.1} parent=27 // loop_header
              %s46 = sphi 0, %s50
              %p47 = scmp.ge.s32.totalorder %s46, 1
              %s51 = sphi %s0, %s0
              %s52 = sphi [#allocation2], [#allocation2]
            $region38: #{forward.1} parent=27 // loop_header_branch
              %49 = sbr.rel (%p47) target = $region42
            $region39: #{forward.1} parent=27 // loop_body
              %v53 = vld [vmem:[%s51] sm:$0xf]
              %54 = vst [vmem:[%s52] sm:$0xf] %v53
              %v55 = vld [vmem:[%s51 + $0x4] sm:$0xf]
              %56 = vst [vmem:[%s52 + $0x10] sm:$0xf] %v55
            $region40: #{forward.1} parent=27 // loop_footer
              %s50 = sadd.s32 1, %s46
            $region41: #{forward.1} parent=27 // loop_footer_branch
              %45 = sbr.rel target = $region37
            $region42: #{forward.1} parent=27 // loop_exit
              _
          $region28: #{forward.1} parent=12 // pred_fallthru
            _
        $region13: #{forward.1} parent=8 // pred_fallthru
          _
        // Predicated region
        $region14: #{forward.1} parent=8 // pred_check
          _
        $region15: #{forward.1} parent=8 // pred_check_branch
          %20 = sbr.rel (0) target = $region17
        $region16: #{forward.1} parent=8 // pred_region
          loop: start=0, step=1, limit=1
          $region18: #{forward.1} parent=16 // loop_pre_header
            _
          $region19: #{forward.1} parent=16 // loop_header
            %s23 = sphi 0, %s27
            %p24 = scmp.ge.s32.totalorder %s23, 1
            %s28 = sphi %s0, %s0
            %s29 = sphi [#allocation2], [#allocation2]
          $region20: #{forward.1} parent=16 // loop_header_branch
            %26 = sbr.rel (%p24) target = $region24
          $region21: #{forward.1} parent=16 // loop_body
            %v30 = vld [vmem:[%s28] sm:$0xf]
            %31 = vst [vmem:[%s29] sm:$0xf] %v30
            %v32 = vld [vmem:[%s28 + $0x4] sm:$0xf]
            %33 = vst [vmem:[%s29 + $0x10] sm:$0xf] %v32
          $region22: #{forward.1} parent=16 // loop_footer
            %s27 = sadd.s32 1, %s23
          $region23: #{forward.1} parent=16 // loop_footer_branch
            %22 = sbr.rel target = $region19
          $region24: #{forward.1} parent=16 // loop_exit
            _
        $region17: #{forward.1} parent=8 // pred_fallthru
          _
      $region9: #{forward.1} parent=4 // pred_fallthru
        _
      %57 = vnop
    $region5: #{forward.1} parent=1 // pred_fallthru
      _
    // Predicated region
    $region43: #{forward.1} parent=1 // pred_check
      _
    $region44: #{forward.1} parent=1 // pred_check_branch
      %59 = sbr.rel (0) target = $region46
    $region45: #{forward.1} parent=1 // pred_region
      _
    $region46: #{forward.1} parent=1 // pred_fallthru
      _
    // Predicated region
    $region47: #{forward.1} parent=1 // pred_check
      _
    $region48: #{forward.1} parent=1 // pred_check_branch
      %61 = sbr.rel (0) target = $region50
    $region49: #{forward.1} parent=1 // pred_region
      _
    $region50: #{forward.1} parent=1 // pred_fallthru
      _
    // Predicated region
    $region51: #{forward.1} parent=1 // pred_check
      _
    $region52: #{forward.1} parent=1 // pred_check_branch
      %63 = sbr.rel (0) target = $region54
    $region53: #{forward.1} parent=1 // pred_region
      _
    $region54: #{forward.1} parent=1 // pred_fallthru
      _
    // Predicated region
    $region55: #{forward.1} parent=1 // pred_check
      _
    $region56: #{forward.1} parent=1 // pred_check_branch
      %65 = sbr.rel (0) target = $region58
    $region57: #{forward.1} parent=1 // pred_region
      _
    $region58: #{forward.1} parent=1 // pred_fallthru
      _
    // Predicated region
    $region59: #{forward.1} parent=1 // pred_check
      _
    $region60: #{forward.1} parent=1 // pred_check_branch
      %67 = sbr.rel (0) target = $region62
    $region61: #{forward.1} parent=1 // pred_region
      _
    $region62: #{forward.1} parent=1 // pred_fallthru
      _
    // Predicated region
    $region63: #{forward.1} parent=1 // pred_check
      _
    $region64: #{forward.1} parent=1 // pred_check_branch
      %69 = sbr.rel (0) target = $region66
    $region65: #{forward.1} parent=1 // pred_region
      _
    $region66: #{forward.1} parent=1 // pred_fallthru
      _
    // Predicated region
    $region67: #{forward.1} parent=1 // pred_check
      _
    $region68: #{forward.1} parent=1 // pred_check_branch
      %71 = sbr.rel (0) target = $region70
    $region69: #{forward.1} parent=1 // pred_region
      _
    $region70: #{forward.1} parent=1 // pred_fallthru
      _
    // Predicated region
    $region71: #{forward.1} parent=1 // pred_check
      _
    $region72: #{forward.1} parent=1 // pred_check_branch
      %73 = sbr.rel (0) target = $region74
    $region73: #{forward.1} parent=1 // pred_region
      _
    $region74: #{forward.1} parent=1 // pred_fallthru
      _
    %v75 = vld [vmem:[%s1] sm:$0xff]
    %77 = vrot.lane.b32.xlu0 %v75, 127
    %v78 = vpop.permute.xlu0 %77
    %v80 = vadd.f32 %v75, %v78
    %v81 = vrcp.pop %v80
    %v82 = vmul.f32 1.0, %v81
    %v83 = vld [vmem:[#allocation2] sm:$0xf]
    %v84 = vld [vmem:[#allocation2 + $0x4] sm:$0xf]
    %v85 = vld [vmem:[#allocation2 + $0x8] sm:$0xf]
    %v86 = vld [vmem:[#allocation2 + $0xc] sm:$0xf]
    %v87 = vunpack.c.l.bf16 %v83
    %v88 = vunpack.c.l.bf16 %v84
    %v89 = vunpack.c.l.bf16 %v85
    %v90 = vunpack.c.l.bf16 %v86
    %v91 = vmul.f32 %v75, %v82
    %93 = vset.pattern.permute.xlu0 0
    %94 = vperm.xlu0 %93, %v91
    %v95 = vpop.permute.xlu0 %94
    %v97 = vunpack.c.l.s4 269488144
    %v98 = vunpack.c.0.s8 %v97
    %v99 = vlaneseq
    %v100 = vshrl.u32 %v99, 7
    %v101 = vsub.s32 %v98, %v100
    %v102 = vrot.slane %v95, %v101
    %v104 = vunpack.c.l.s4 842150450
    %v105 = vunpack.c.0.s8 %v104
    %v106 = vlaneseq
    %v107 = vshrl.u32 %v106, 7
    %v108 = vsub.s32 %v105, %v107
    %v109 = vrot.slane %v95, %v108
    %v111 = vunpack.c.l.s4 1414812756
    %v112 = vunpack.c.0.s8 %v111
    %v113 = vlaneseq
    %v114 = vshrl.u32 %v113, 7
    %v115 = vsub.s32 %v112, %v114
    %v116 = vrot.slane %v95, %v115
    %v118 = vunpack.c.l.s4 1987475062
    %v119 = vunpack.c.0.s8 %v118
    %v120 = vlaneseq
    %v121 = vshrl.u32 %v120, 7
    %v122 = vsub.s32 %v119, %v121
    %v123 = vrot.slane %v95, %v122
    %v128 = vmul.f32 %v87, %v102
    %v129 = vmul.f32 %v88, %v109
    %v130 = vmul.f32 %v89, %v116
    %v131 = vmul.f32 %v90, %v123
    %s132 = scalar_lea.vmem [#allocation2], 16
    %v133 = vld [vmem:[%s132] sm:$0xf]
    %v134 = vld [vmem:[%s132 + $0x4] sm:$0xf]
    %v135 = vld [vmem:[%s132 + $0x8] sm:$0xf]
    %v136 = vld [vmem:[%s132 + $0xc] sm:$0xf]
    %v137 = vunpack.c.l.bf16 %v133
    %v138 = vunpack.c.l.bf16 %v134
    %v139 = vunpack.c.l.bf16 %v135
    %v140 = vunpack.c.l.bf16 %v136
    %142 = vrot.lane.b32.xlu0 %v82, 1
    %v143 = vpop.permute.xlu0 %142
    %v145 = vmul.f32 %v75, %v143
    %147 = vset.pattern.permute.xlu0 1
    %148 = vperm.xlu0 %147, %v145
    %v149 = vpop.permute.xlu0 %148
    %v151 = vunpack.c.l.s4 269488144
    %v152 = vunpack.c.0.s8 %v151
    %v153 = vlaneseq
    %v154 = vshrl.u32 %v153, 7
    %v155 = vsub.s32 %v152, %v154
    %v156 = vrot.slane %v149, %v155
    %v158 = vunpack.c.l.s4 842150450
    %v159 = vunpack.c.0.s8 %v158
    %v160 = vlaneseq
    %v161 = vshrl.u32 %v160, 7
    %v162 = vsub.s32 %v159, %v161
    %v163 = vrot.slane %v149, %v162
    %v165 = vunpack.c.l.s4 1414812756
    %v166 = vunpack.c.0.s8 %v165
    %v167 = vlaneseq
    %v168 = vshrl.u32 %v167, 7
    %v169 = vsub.s32 %v166, %v168
    %v170 = vrot.slane %v149, %v169
    %v172 = vunpack.c.l.s4 1987475062
    %v173 = vunpack.c.0.s8 %v172
    %v174 = vlaneseq
    %v175 = vshrl.u32 %v174, 7
    %v176 = vsub.s32 %v173, %v175
    %v177 = vrot.slane %v149, %v176
    %v182 = vmul.f32 %v137, %v156
    %v183 = vmul.f32 %v138, %v163
    %v184 = vmul.f32 %v139, %v170
    %v185 = vmul.f32 %v140, %v177
    %v186 = vadd.f32 %v128, %v182
    %v187 = vadd.f32 %v129, %v183
    %v188 = vadd.f32 %v130, %v184
    %v189 = vadd.f32 %v131, %v185
    %v194 = vcombine.low %v186, %v187
    %v195 = vcombine.high %v186, %v187
    %v196 = vcombine.low %v188, %v189
    %v197 = vcombine.high %v188, %v189
    %v199 = vunpack.c.l.s4 1983009808
    %v200 = vunpack.c.0.s8 %v199
    %v201 = vlaneseq
    %v202 = vshrl.u32 %v201, 7
    %v203 = vsub.s32 %v200, %v202
    %v204 = vrot.slane %v194, %v203
    %v206 = vunpack.c.l.s4 1983009808
    %v207 = vunpack.c.0.s8 %v206
    %v208 = vlaneseq
    %v209 = vshrl.u32 %v208, 7
    %v210 = vsub.s32 %v207, %v209
    %v211 = vrot.slane %v195, %v210
    %v213 = vunpack.c.l.s4 1983009808
    %v214 = vunpack.c.0.s8 %v213
    %v215 = vlaneseq
    %v216 = vshrl.u32 %v215, 7
    %v217 = vsub.s32 %v214, %v216
    %v218 = vrot.slane %v196, %v217
    %v220 = vunpack.c.l.s4 1983009808
    %v221 = vunpack.c.0.s8 %v220
    %v222 = vlaneseq
    %v223 = vshrl.u32 %v222, 7
    %v224 = vsub.s32 %v221, %v223
    %v225 = vrot.slane %v197, %v224
    %v226 = vcombine.low %v204, %v218
    %v227 = vcombine.high %v204, %v218
    %v228 = vcombine.low %v211, %v225
    %v229 = vcombine.high %v211, %v225
    %v234 = vpack.c.bf16 %v226, %v226
    %v235 = vpack.c.bf16 %v227, %v227
    %v236 = vpack.c.bf16 %v228, %v228
    %v237 = vpack.c.bf16 %v229, %v229
    %v238 = vld [vmem:[%s2] sm:$0xff]
    %v239 = vld [vmem:[%s2 + $0x8] sm:$0xff]
    %v240 = vld [vmem:[%s2 + $0x10] sm:$0xff]
    %v241 = vld [vmem:[%s2 + $0x18] sm:$0xff]
    %v242 = vld [vmem:[%s2 + $0x20] sm:$0xff]
    %v243 = vld [vmem:[%s2 + $0x28] sm:$0xff]
    %v244 = vld [vmem:[%s2 + $0x30] sm:$0xff]
    %v245 = vld [vmem:[%s2 + $0x38] sm:$0xff]
    %v246 = vld [vmem:[%s2 + $0x40] sm:$0xff]
    %v247 = vld [vmem:[%s2 + $0x48] sm:$0xff]
    %v248 = vld [vmem:[%s2 + $0x50] sm:$0xff]
    %v249 = vld [vmem:[%s2 + $0x58] sm:$0xff]
    %v250 = vld [vmem:[%s2 + $0x60] sm:$0xff]
    %v251 = vld [vmem:[%s2 + $0x68] sm:$0xff]
    %v252 = vld [vmem:[%s2 + $0x70] sm:$0xff]
    %v253 = vld [vmem:[%s2 + $0x78] sm:$0xff]
    %v254 = vld [vmem:[%s2 + $0x80] sm:$0xff]
    %v255 = vld [vmem:[%s2 + $0x88] sm:$0xff]
    %v256 = vld [vmem:[%s2 + $0x90] sm:$0xff]
    %v257 = vld [vmem:[%s2 + $0x98] sm:$0xff]
    %v258 = vld [vmem:[%s2 + $0xa0] sm:$0xff]
    %v259 = vld [vmem:[%s2 + $0xa8] sm:$0xff]
    %v260 = vld [vmem:[%s2 + $0xb0] sm:$0xff]
    %v261 = vld [vmem:[%s2 + $0xb8] sm:$0xff]
    %v262 = vld [vmem:[%s2 + $0xc0] sm:$0xff]
    %v263 = vld [vmem:[%s2 + $0xc8] sm:$0xff]
    %v264 = vld [vmem:[%s2 + $0xd0] sm:$0xff]
    %v265 = vld [vmem:[%s2 + $0xd8] sm:$0xff]
    %v266 = vld [vmem:[%s2 + $0xe0] sm:$0xff]
    %v267 = vld [vmem:[%s2 + $0xe8] sm:$0xff]
    %v268 = vld [vmem:[%s2 + $0xf0] sm:$0xff]
    %v269 = vld [vmem:[%s2 + $0xf8] sm:$0xff]
    %v270 = vld [vmem:[%s2 + $0x100] sm:$0xff]
    %v271 = vld [vmem:[%s2 + $0x108] sm:$0xff]
    %v272 = vld [vmem:[%s2 + $0x110] sm:$0xff]
    %v273 = vld [vmem:[%s2 + $0x118] sm:$0xff]
    %v274 = vld [vmem:[%s2 + $0x120] sm:$0xff]
    %v275 = vld [vmem:[%s2 + $0x128] sm:$0xff]
    %v276 = vld [vmem:[%s2 + $0x130] sm:$0xff]
    %v277 = vld [vmem:[%s2 + $0x138] sm:$0xff]
    %v278 = vld [vmem:[%s2 + $0x140] sm:$0xff]
    %v279 = vld [vmem:[%s2 + $0x148] sm:$0xff]
    %v280 = vld [vmem:[%s2 + $0x150] sm:$0xff]
    %v281 = vld [vmem:[%s2 + $0x158] sm:$0xff]
    %v282 = vld [vmem:[%s2 + $0x160] sm:$0xff]
    %v283 = vld [vmem:[%s2 + $0x168] sm:$0xff]
    %v284 = vld [vmem:[%s2 + $0x170] sm:$0xff]
    %v285 = vld [vmem:[%s2 + $0x178] sm:$0xff]
    %v286 = vld [vmem:[%s2 + $0x180] sm:$0xff]
    %v287 = vld [vmem:[%s2 + $0x188] sm:$0xff]
    %v288 = vld [vmem:[%s2 + $0x190] sm:$0xff]
    %v289 = vld [vmem:[%s2 + $0x198] sm:$0xff]
    %v290 = vld [vmem:[%s2 + $0x1a0] sm:$0xff]
    %v291 = vld [vmem:[%s2 + $0x1a8] sm:$0xff]
    %v292 = vld [vmem:[%s2 + $0x1b0] sm:$0xff]
    %v293 = vld [vmem:[%s2 + $0x1b8] sm:$0xff]
    %v294 = vld [vmem:[%s2 + $0x1c0] sm:$0xff]
    %v295 = vld [vmem:[%s2 + $0x1c8] sm:$0xff]
    %v296 = vld [vmem:[%s2 + $0x1d0] sm:$0xff]
    %v297 = vld [vmem:[%s2 + $0x1d8] sm:$0xff]
    %v298 = vld [vmem:[%s2 + $0x1e0] sm:$0xff]
    %v299 = vld [vmem:[%s2 + $0x1e8] sm:$0xff]
    %v300 = vld [vmem:[%s2 + $0x1f0] sm:$0xff]
    %v301 = vld [vmem:[%s2 + $0x1f8] sm:$0xff]
    %v302 = vld [vmem:[%s3] sm:$0x3]
    %v304 = vlaneseq
    %v305 = vshrl.u32 %v304, 7
    %v306 = vsub.s32 0, %v305
    %v307 = vrot.slane %v302, %v306
    %v308 = vlaneseq
    %v309 = vshrl.u32 %v308, 7
    %v310 = vsub.s32 1, %v309
    %v311 = vrot.slane %v302, %v310
    %v378 = vunpack.c.l.b16 %v238
    %v379 = vunpack.c.h.b16 %v238
    %v380 = vunpack.c.l.b16 %v239
    %v381 = vunpack.c.h.b16 %v239
    %v382 = vunpack.c.l.b16 %v240
    %v383 = vunpack.c.h.b16 %v240
    %v384 = vunpack.c.l.b16 %v241
    %v385 = vunpack.c.h.b16 %v241
    %v386 = vunpack.c.l.b16 %v242
    %v387 = vunpack.c.h.b16 %v242
    %v388 = vunpack.c.l.b16 %v243
    %v389 = vunpack.c.h.b16 %v243
    %v390 = vunpack.c.l.b16 %v244
    %v391 = vunpack.c.h.b16 %v244
    %v392 = vunpack.c.l.b16 %v245
    %v393 = vunpack.c.h.b16 %v245
    %v394 = vunpack.c.l.b16 %v246
    %v395 = vunpack.c.h.b16 %v246
    %v396 = vunpack.c.l.b16 %v247
    %v397 = vunpack.c.h.b16 %v247
    %v398 = vunpack.c.l.b16 %v248
    %v399 = vunpack.c.h.b16 %v248
    %v400 = vunpack.c.l.b16 %v249
    %v401 = vunpack.c.h.b16 %v249
    %v402 = vunpack.c.l.b16 %v250
    %v403 = vunpack.c.h.b16 %v250
    %v404 = vunpack.c.l.b16 %v251
    %v405 = vunpack.c.h.b16 %v251
    %v406 = vunpack.c.l.b16 %v252
    %v407 = vunpack.c.h.b16 %v252
    %v408 = vunpack.c.l.b16 %v253
    %v409 = vunpack.c.h.b16 %v253
    %v410 = vunpack.c.l.b16 %v254
    %v411 = vunpack.c.h.b16 %v254
    %v412 = vunpack.c.l.b16 %v255
    %v413 = vunpack.c.h.b16 %v255
    %v414 = vunpack.c.l.b16 %v256
    %v415 = vunpack.c.h.b16 %v256
    %v416 = vunpack.c.l.b16 %v257
    %v417 = vunpack.c.h.b16 %v257
    %v418 = vunpack.c.l.b16 %v258
    %v419 = vunpack.c.h.b16 %v258
    %v420 = vunpack.c.l.b16 %v259
    %v421 = vunpack.c.h.b16 %v259
    %v422 = vunpack.c.l.b16 %v260
    %v423 = vunpack.c.h.b16 %v260
    %v424 = vunpack.c.l.b16 %v261
    %v425 = vunpack.c.h.b16 %v261
    %v426 = vunpack.c.l.b16 %v262
    %v427 = vunpack.c.h.b16 %v262
    %v428 = vunpack.c.l.b16 %v263
    %v429 = vunpack.c.h.b16 %v263
    %v430 = vunpack.c.l.b16 %v264
    %v431 = vunpack.c.h.b16 %v264
    %v432 = vunpack.c.l.b16 %v265
    %v433 = vunpack.c.h.b16 %v265
    %v434 = vunpack.c.l.b16 %v266
    %v435 = vunpack.c.h.b16 %v266
    %v436 = vunpack.c.l.b16 %v267
    %v437 = vunpack.c.h.b16 %v267
    %v438 = vunpack.c.l.b16 %v268
    %v439 = vunpack.c.h.b16 %v268
    %v440 = vunpack.c.l.b16 %v269
    %v441 = vunpack.c.h.b16 %v269
    %v442 = vunpack.c.l.b16 %v270
    %v443 = vunpack.c.h.b16 %v270
    %v444 = vunpack.c.l.b16 %v271
    %v445 = vunpack.c.h.b16 %v271
    %v446 = vunpack.c.l.b16 %v272
    %v447 = vunpack.c.h.b16 %v272
    %v448 = vunpack.c.l.b16 %v273
    %v449 = vunpack.c.h.b16 %v273
    %v450 = vunpack.c.l.b16 %v274
    %v451 = vunpack.c.h.b16 %v274
    %v452 = vunpack.c.l.b16 %v275
    %v453 = vunpack.c.h.b16 %v275
    %v454 = vunpack.c.l.b16 %v276
    %v455 = vunpack.c.h.b16 %v276
    %v456 = vunpack.c.l.b16 %v277
    %v457 = vunpack.c.h.b16 %v277
    %v458 = vunpack.c.l.b16 %v278
    %v459 = vunpack.c.h.b16 %v278
    %v460 = vunpack.c.l.b16 %v279
    %v461 = vunpack.c.h.b16 %v279
    %v462 = vunpack.c.l.b16 %v280
    %v463 = vunpack.c.h.b16 %v280
    %v464 = vunpack.c.l.b16 %v281
    %v465 = vunpack.c.h.b16 %v281
    %v466 = vunpack.c.l.b16 %v282
    %v467 = vunpack.c.h.b16 %v282
    %v468 = vunpack.c.l.b16 %v283
    %v469 = vunpack.c.h.b16 %v283
    %v470 = vunpack.c.l.b16 %v284
    %v471 = vunpack.c.h.b16 %v284
    %v472 = vunpack.c.l.b16 %v285
    %v473 = vunpack.c.h.b16 %v285
    %v474 = vunpack.c.l.b16 %v286
    %v475 = vunpack.c.h.b16 %v286
    %v476 = vunpack.c.l.b16 %v287
    %v477 = vunpack.c.h.b16 %v287
    %v478 = vunpack.c.l.b16 %v288
    %v479 = vunpack.c.h.b16 %v288
    %v480 = vunpack.c.l.b16 %v289
    %v481 = vunpack.c.h.b16 %v289
    %v482 = vunpack.c.l.b16 %v290
    %v483 = vunpack.c.h.b16 %v290
    %v484 = vunpack.c.l.b16 %v291
    %v485 = vunpack.c.h.b16 %v291
    %v486 = vunpack.c.l.b16 %v292
    %v487 = vunpack.c.h.b16 %v292
    %v488 = vunpack.c.l.b16 %v293
    %v489 = vunpack.c.h.b16 %v293
    %v490 = vunpack.c.l.b16 %v294
    %v491 = vunpack.c.h.b16 %v294
    %v492 = vunpack.c.l.b16 %v295
    %v493 = vunpack.c.h.b16 %v295
    %v494 = vunpack.c.l.b16 %v296
    %v495 = vunpack.c.h.b16 %v296
    %v496 = vunpack.c.l.b16 %v297
    %v497 = vunpack.c.h.b16 %v297
    %v498 = vunpack.c.l.b16 %v298
    %v499 = vunpack.c.h.b16 %v298
    %v500 = vunpack.c.l.b16 %v299
    %v501 = vunpack.c.h.b16 %v299
    %v502 = vunpack.c.l.b16 %v300
    %v503 = vunpack.c.h.b16 %v300
    %v504 = vunpack.c.l.b16 %v301
    %v505 = vunpack.c.h.b16 %v301
    %v506 = vpack.c.b16 %v380, %v378
    %v507 = vpack.c.b16 %v381, %v379
    %v508 = vpack.c.b16 %v384, %v382
    %v509 = vpack.c.b16 %v385, %v383
    %v510 = vpack.c.b16 %v388, %v386
    %v511 = vpack.c.b16 %v389, %v387
    %v512 = vpack.c.b16 %v392, %v390
    %v513 = vpack.c.b16 %v393, %v391
    %v514 = vpack.c.b16 %v396, %v394
    %v515 = vpack.c.b16 %v397, %v395
    %v516 = vpack.c.b16 %v400, %v398
    %v517 = vpack.c.b16 %v401, %v399
    %v518 = vpack.c.b16 %v404, %v402
    %v519 = vpack.c.b16 %v405, %v403
    %v520 = vpack.c.b16 %v408, %v406
    %v521 = vpack.c.b16 %v409, %v407
    %v522 = vpack.c.b16 %v412, %v410
    %v523 = vpack.c.b16 %v413, %v411
    %v524 = vpack.c.b16 %v416, %v414
    %v525 = vpack.c.b16 %v417, %v415
    %v526 = vpack.c.b16 %v420, %v418
    %v527 = vpack.c.b16 %v421, %v419
    %v528 = vpack.c.b16 %v424, %v422
    %v529 = vpack.c.b16 %v425, %v423
    %v530 = vpack.c.b16 %v428, %v426
    %v531 = vpack.c.b16 %v429, %v427
    %v532 = vpack.c.b16 %v432, %v430
    %v533 = vpack.c.b16 %v433, %v431
    %v534 = vpack.c.b16 %v436, %v434
    %v535 = vpack.c.b16 %v437, %v435
    %v536 = vpack.c.b16 %v440, %v438
    %v537 = vpack.c.b16 %v441, %v439
    %v538 = vpack.c.b16 %v444, %v442
    %v539 = vpack.c.b16 %v445, %v443
    %v540 = vpack.c.b16 %v448, %v446
    %v541 = vpack.c.b16 %v449, %v447
    %v542 = vpack.c.b16 %v452, %v450
    %v543 = vpack.c.b16 %v453, %v451
    %v544 = vpack.c.b16 %v456, %v454
    %v545 = vpack.c.b16 %v457, %v455
    %v546 = vpack.c.b16 %v460, %v458
    %v547 = vpack.c.b16 %v461, %v459
    %v548 = vpack.c.b16 %v464, %v462
    %v549 = vpack.c.b16 %v465, %v463
    %v550 = vpack.c.b16 %v468, %v466
    %v551 = vpack.c.b16 %v469, %v467
    %v552 = vpack.c.b16 %v472, %v470
    %v553 = vpack.c.b16 %v473, %v471
    %v554 = vpack.c.b16 %v476, %v474
    %v555 = vpack.c.b16 %v477, %v475
    %v556 = vpack.c.b16 %v480, %v478
    %v557 = vpack.c.b16 %v481, %v479
    %v558 = vpack.c.b16 %v484, %v482
    %v559 = vpack.c.b16 %v485, %v483
    %v560 = vpack.c.b16 %v488, %v486
    %v561 = vpack.c.b16 %v489, %v487
    %v562 = vpack.c.b16 %v492, %v490
    %v563 = vpack.c.b16 %v493, %v491
    %v564 = vpack.c.b16 %v496, %v494
    %v565 = vpack.c.b16 %v497, %v495
    %v566 = vpack.c.b16 %v500, %v498
    %v567 = vpack.c.b16 %v501, %v499
    %v568 = vpack.c.b16 %v504, %v502
    %v569 = vpack.c.b16 %v505, %v503
    %634 = vmatprep.subr.bf16.mxu0 %v507
    %635 = vmatpush1.bf16.msra.mxu0 %v506
    %636 = vmatprep.subr.bf16.mxu0 %v509
    %637 = vmatpush1.bf16.msra.mxu0 %v508
    %638 = vmatprep.subr.bf16.mxu0 %v511
    %639 = vmatpush1.bf16.msra.mxu0 %v510
    %640 = vmatprep.subr.bf16.mxu0 %v513
    %641 = vmatpush1.bf16.msra.mxu0 %v512
    %642 = vmatprep.subr.bf16.mxu0 %v515
    %643 = vmatpush1.bf16.msra.mxu0 %v514
    %644 = vmatprep.subr.bf16.mxu0 %v517
    %645 = vmatpush1.bf16.msra.mxu0 %v516
    %646 = vmatprep.subr.bf16.mxu0 %v519
    %647 = vmatpush1.bf16.msra.mxu0 %v518
    %648 = vmatprep.subr.bf16.mxu0 %v521
    %649 = vmatpush1.bf16.msra.mxu0 %v520
    %650 = vmatprep.subr.bf16.mxu0 %v523
    %651 = vmatpush1.bf16.msra.mxu0 %v522
    %652 = vmatprep.subr.bf16.mxu0 %v525
    %653 = vmatpush1.bf16.msra.mxu0 %v524
    %654 = vmatprep.subr.bf16.mxu0 %v527
    %655 = vmatpush1.bf16.msra.mxu0 %v526
    %656 = vmatprep.subr.bf16.mxu0 %v529
    %657 = vmatpush1.bf16.msra.mxu0 %v528
    %658 = vmatprep.subr.bf16.mxu0 %v531
    %659 = vmatpush1.bf16.msra.mxu0 %v530
    %660 = vmatprep.subr.bf16.mxu0 %v533
    %661 = vmatpush1.bf16.msra.mxu0 %v532
    %662 = vmatprep.subr.bf16.mxu0 %v535
    %663 = vmatpush1.bf16.msra.mxu0 %v534
    %664 = vmatprep.subr.bf16.mxu0 %v537
    %665 = vmatpush1.bf16.msra.mxu0 %v536
    %666 = vmatprep.mubr.bf16.mxu0 %v235
    %667 = vmatmul.mubr.bf16.gmra.mrb[0].mxu0 %v234
    %v668 = vpop.f32.mrb[0].mxu0
    %v669 = vadd.f32 %v307, %v668
    %v670 = vpop.f32.mrb[0].mxu0
    %v671 = vadd.f32 %v311, %v670
    %v672 = vpop.f32.mrb[0].mxu0
    %v673 = vpop.f32.mrb[0].mxu0
    %674 = vdwg.mxu0
    %675 = vmatprep.subr.bf16.mxu0 %v539
    %676 = vmatpush1.bf16.msra.mxu0 %v538
    %677 = vmatprep.subr.bf16.mxu0 %v541
    %678 = vmatpush1.bf16.msra.mxu0 %v540
    %679 = vmatprep.subr.bf16.mxu0 %v543
    %680 = vmatpush1.bf16.msra.mxu0 %v542
    %681 = vmatprep.subr.bf16.mxu0 %v545
    %682 = vmatpush1.bf16.msra.mxu0 %v544
    %683 = vmatprep.subr.bf16.mxu0 %v547
    %684 = vmatpush1.bf16.msra.mxu0 %v546
    %685 = vmatprep.subr.bf16.mxu0 %v549
    %686 = vmatpush1.bf16.msra.mxu0 %v548
    %687 = vmatprep.subr.bf16.mxu0 %v551
    %688 = vmatpush1.bf16.msra.mxu0 %v550
    %689 = vmatprep.subr.bf16.mxu0 %v553
    %690 = vmatpush1.bf16.msra.mxu0 %v552
    %691 = vmatprep.subr.bf16.mxu0 %v555
    %692 = vmatpush1.bf16.msra.mxu0 %v554
    %693 = vmatprep.subr.bf16.mxu0 %v557
    %694 = vmatpush1.bf16.msra.mxu0 %v556
    %695 = vmatprep.subr.bf16.mxu0 %v559
    %696 = vmatpush1.bf16.msra.mxu0 %v558
    %697 = vmatprep.subr.bf16.mxu0 %v561
    %698 = vmatpush1.bf16.msra.mxu0 %v560
    %699 = vmatprep.subr.bf16.mxu0 %v563
    %700 = vmatpush1.bf16.msra.mxu0 %v562
    %701 = vmatprep.subr.bf16.mxu0 %v565
    %702 = vmatpush1.bf16.msra.mxu0 %v564
    %703 = vmatprep.subr.bf16.mxu0 %v567
    %704 = vmatpush1.bf16.msra.mxu0 %v566
    %705 = vmatprep.subr.bf16.mxu0 %v569
    %706 = vmatpush1.bf16.msra.mxu0 %v568
    %707 = vmatprep.mubr.bf16.mxu0 %v237
    %708 = vmatmul.mubr.bf16.gmra.mrb[0].mxu0 %v236
    %v709 = vpop.f32.mrb[0].mxu0
    %v710 = vadd.f32 %v669, %v709
    %v711 = vpop.f32.mrb[0].mxu0
    %v712 = vadd.f32 %v671, %v711
    %v713 = vpop.f32.mrb[0].mxu0
    %v714 = vpop.f32.mrb[0].mxu0
    %715 = vdwg.mxu0
    %v716 = vmax.f32 %v710, 0.0
    %v717 = vmax.f32 %v712, 0.0
    %v718 = vpack.c.bf16 %v716, %v716
    %v719 = vpack.c.bf16 %v717, %v717
    %v720 = vld [vmem:[%s4] sm:$0xf]
    %v721 = vld [vmem:[%s4 + $0x4] sm:$0xf]
    %v722 = vld [vmem:[%s4 + $0x8] sm:$0xf]
    %v723 = vld [vmem:[%s4 + $0xc] sm:$0xf]
    %v724 = vld [vmem:[%s4 + $0x10] sm:$0xf]
    %v725 = vld [vmem:[%s4 + $0x14] sm:$0xf]
    %v726 = vld [vmem:[%s4 + $0x18] sm:$0xf]
    %v727 = vld [vmem:[%s4 + $0x1c] sm:$0xf]
    %v728 = vld [vmem:[%s4 + $0x20] sm:$0xf]
    %v729 = vld [vmem:[%s4 + $0x24] sm:$0xf]
    %v730 = vld [vmem:[%s4 + $0x28] sm:$0xf]
    %v731 = vld [vmem:[%s4 + $0x2c] sm:$0xf]
    %v732 = vld [vmem:[%s4 + $0x30] sm:$0xf]
    %v733 = vld [vmem:[%s4 + $0x34] sm:$0xf]
    %v734 = vld [vmem:[%s4 + $0x38] sm:$0xf]
    %v735 = vld [vmem:[%s4 + $0x3c] sm:$0xf]
    %v736 = vld [vmem:[%s4 + $0x40] sm:$0xf]
    %v737 = vld [vmem:[%s4 + $0x44] sm:$0xf]
    %v738 = vld [vmem:[%s4 + $0x48] sm:$0xf]
    %v739 = vld [vmem:[%s4 + $0x4c] sm:$0xf]
    %v740 = vld [vmem:[%s4 + $0x50] sm:$0xf]
    %v741 = vld [vmem:[%s4 + $0x54] sm:$0xf]
    %v742 = vld [vmem:[%s4 + $0x58] sm:$0xf]
    %v743 = vld [vmem:[%s4 + $0x5c] sm:$0xf]
    %v744 = vld [vmem:[%s4 + $0x60] sm:$0xf]
    %v745 = vld [vmem:[%s4 + $0x64] sm:$0xf]
    %v746 = vld [vmem:[%s4 + $0x68] sm:$0xf]
    %v747 = vld [vmem:[%s4 + $0x6c] sm:$0xf]
    %v748 = vld [vmem:[%s4 + $0x70] sm:$0xf]
    %v749 = vld [vmem:[%s4 + $0x74] sm:$0xf]
    %v750 = vld [vmem:[%s4 + $0x78] sm:$0xf]
    %v751 = vld [vmem:[%s4 + $0x7c] sm:$0xf]
    %v752 = vld [vmem:[%s5] sm:$0x1]
    %v754 = vlaneseq
    %v755 = vshrl.u32 %v754, 7
    %v756 = vsub.s32 0, %v755
    %v757 = vrot.slane %v752, %v756
    %v791 = vunpack.c.l.b16 %v720
    %v792 = vunpack.c.l.b16 %v721
    %v793 = vunpack.c.l.b16 %v722
    %v794 = vunpack.c.l.b16 %v723
    %v795 = vunpack.c.l.b16 %v724
    %v796 = vunpack.c.l.b16 %v725
    %v797 = vunpack.c.l.b16 %v726
    %v798 = vunpack.c.l.b16 %v727
    %v799 = vunpack.c.l.b16 %v728
    %v800 = vunpack.c.l.b16 %v729
    %v801 = vunpack.c.l.b16 %v730
    %v802 = vunpack.c.l.b16 %v731
    %v803 = vunpack.c.l.b16 %v732
    %v804 = vunpack.c.l.b16 %v733
    %v805 = vunpack.c.l.b16 %v734
    %v806 = vunpack.c.l.b16 %v735
    %v807 = vunpack.c.l.b16 %v736
    %v808 = vunpack.c.l.b16 %v737
    %v809 = vunpack.c.l.b16 %v738
    %v810 = vunpack.c.l.b16 %v739
    %v811 = vunpack.c.l.b16 %v740
    %v812 = vunpack.c.l.b16 %v741
    %v813 = vunpack.c.l.b16 %v742
    %v814 = vunpack.c.l.b16 %v743
    %v815 = vunpack.c.l.b16 %v744
    %v816 = vunpack.c.l.b16 %v745
    %v817 = vunpack.c.l.b16 %v746
    %v818 = vunpack.c.l.b16 %v747
    %v819 = vunpack.c.l.b16 %v748
    %v820 = vunpack.c.l.b16 %v749
    %v821 = vunpack.c.l.b16 %v750
    %v822 = vunpack.c.l.b16 %v751
    %v823 = vpack.c.b16 %v792, %v791
    %v824 = vpack.c.b16 %v794, %v793
    %v825 = vpack.c.b16 %v796, %v795
    %v826 = vpack.c.b16 %v798, %v797
    %v827 = vpack.c.b16 %v800, %v799
    %v828 = vpack.c.b16 %v802, %v801
    %v829 = vpack.c.b16 %v804, %v803
    %v830 = vpack.c.b16 %v806, %v805
    %v831 = vpack.c.b16 %v808, %v807
    %v832 = vpack.c.b16 %v810, %v809
    %v833 = vpack.c.b16 %v812, %v811
    %v834 = vpack.c.b16 %v814, %v813
    %v835 = vpack.c.b16 %v816, %v815
    %v836 = vpack.c.b16 %v818, %v817
    %v837 = vpack.c.b16 %v820, %v819
    %v838 = vpack.c.b16 %v822, %v821
    %855 = vmatprep.subr.bf16.mxu0 0
    %856 = vmatpush1.bf16.msra.mxu0 %v823
    %857 = vmatprep.subr.bf16.mxu0 0
    %858 = vmatpush1.bf16.msra.mxu0 %v824
    %859 = vmatprep.subr.bf16.mxu0 0
    %860 = vmatpush1.bf16.msra.mxu0 %v825
    %861 = vmatprep.subr.bf16.mxu0 0
    %862 = vmatpush1.bf16.msra.mxu0 %v826
    %863 = vmatprep.subr.bf16.mxu0 0
    %864 = vmatpush1.bf16.msra.mxu0 %v827
    %865 = vmatprep.subr.bf16.mxu0 0
    %866 = vmatpush1.bf16.msra.mxu0 %v828
    %867 = vmatprep.subr.bf16.mxu0 0
    %868 = vmatpush1.bf16.msra.mxu0 %v829
    %869 = vmatprep.subr.bf16.mxu0 0
    %870 = vmatpush1.bf16.msra.mxu0 %v830
    %871 = vmatprep.subr.bf16.mxu0 0
    %872 = vmatpush1.bf16.msra.mxu0 %v831
    %873 = vmatprep.subr.bf16.mxu0 0
    %874 = vmatpush1.bf16.msra.mxu0 %v832
    %875 = vmatprep.subr.bf16.mxu0 0
    %876 = vmatpush1.bf16.msra.mxu0 %v833
    %877 = vmatprep.subr.bf16.mxu0 0
    %878 = vmatpush1.bf16.msra.mxu0 %v834
    %879 = vmatprep.subr.bf16.mxu0 0
    %880 = vmatpush1.bf16.msra.mxu0 %v835
    %881 = vmatprep.subr.bf16.mxu0 0
    %882 = vmatpush1.bf16.msra.mxu0 %v836
    %883 = vmatprep.subr.bf16.mxu0 0
    %884 = vmatpush1.bf16.msra.mxu0 %v837
    %885 = vmatprep.subr.bf16.mxu0 0
    %886 = vmatpush1.bf16.msra.mxu0 %v838
    %887 = vmatprep.mubr.bf16.mxu0 %v719
    %888 = vmatmul.mubr.bf16.gmra.mrb[0].mxu0 %v718
    %v889 = vpop.f32.mrb[0].mxu0
    %v890 = vadd.f32 %v757, %v889
    %v891 = vpop.f32.mrb[0].mxu0
    %v892 = vpop.f32.mrb[0].mxu0
    %v893 = vpop.f32.mrb[0].mxu0
    %894 = vdwg.mxu0
    %v895 = vmax.f32 %v890, 0.0
    %v896 = vpack.c.bf16 %v895, %v895
    %v897 = vld [vmem:[%s6] sm:$0xf]
    %v898 = vld [vmem:[%s6 + $0x4] sm:$0xf]
    %v899 = vld [vmem:[%s6 + $0x8] sm:$0xf]
    %v900 = vld [vmem:[%s6 + $0xc] sm:$0xf]
    %v901 = vld [vmem:[%s6 + $0x10] sm:$0xf]
    %v902 = vld [vmem:[%s6 + $0x14] sm:$0xf]
    %v903 = vld [vmem:[%s6 + $0x18] sm:$0xf]
    %v904 = vld [vmem:[%s6 + $0x1c] sm:$0xf]
    %v905 = vld [vmem:[%s6 + $0x20] sm:$0xf]
    %v906 = vld [vmem:[%s6 + $0x24] sm:$0xf]
    %v907 = vld [vmem:[%s6 + $0x28] sm:$0xf]
    %v908 = vld [vmem:[%s6 + $0x2c] sm:$0xf]
    %v909 = vld [vmem:[%s6 + $0x30] sm:$0xf]
    %v910 = vld [vmem:[%s6 + $0x34] sm:$0xf]
    %v911 = vld [vmem:[%s6 + $0x38] sm:$0xf]
    %v912 = vld [vmem:[%s6 + $0x3c] sm:$0xf]
    %v913 = vld [vmem:[%s7] sm:$0x1]
    %v915 = vlaneseq
    %v916 = vshrl.u32 %v915, 7
    %v917 = vsub.s32 0, %v916
    %v918 = vrot.slane %v913, %v917
    %v936 = vunpack.c.l.b16 %v897
    %v937 = vunpack.c.l.b16 %v898
    %v938 = vunpack.c.l.b16 %v899
    %v939 = vunpack.c.l.b16 %v900
    %v940 = vunpack.c.l.b16 %v901
    %v941 = vunpack.c.l.b16 %v902
    %v942 = vunpack.c.l.b16 %v903
    %v943 = vunpack.c.l.b16 %v904
    %v944 = vunpack.c.l.b16 %v905
    %v945 = vunpack.c.l.b16 %v906
    %v946 = vunpack.c.l.b16 %v907
    %v947 = vunpack.c.l.b16 %v908
    %v948 = vunpack.c.l.b16 %v909
    %v949 = vunpack.c.l.b16 %v910
    %v950 = vunpack.c.l.b16 %v911
    %v951 = vunpack.c.l.b16 %v912
    %v952 = vpack.c.b16 %v937, %v936
    %v953 = vpack.c.b16 %v939, %v938
    %v954 = vpack.c.b16 %v941, %v940
    %v955 = vpack.c.b16 %v943, %v942
    %v956 = vpack.c.b16 %v945, %v944
    %v957 = vpack.c.b16 %v947, %v946
    %v958 = vpack.c.b16 %v949, %v948
    %v959 = vpack.c.b16 %v951, %v950
    %968 = vmatprep.subr.bf16.mxu0 0
    %969 = vmatpush1.bf16.msra.mxu0 %v952
    %970 = vmatprep.subr.bf16.mxu0 0
    %971 = vmatpush1.bf16.msra.mxu0 %v953
    %972 = vmatprep.subr.bf16.mxu0 0
    %973 = vmatpush1.bf16.msra.mxu0 %v954
    %974 = vmatprep.subr.bf16.mxu0 0
    %975 = vmatpush1.bf16.msra.mxu0 %v955
    %976 = vmatprep.subr.bf16.mxu0 0
    %977 = vmatpush1.bf16.msra.mxu0 %v956
    %978 = vmatprep.subr.bf16.mxu0 0
    %979 = vmatpush1.bf16.msra.mxu0 %v957
    %980 = vmatprep.subr.bf16.mxu0 0
    %981 = vmatpush1.bf16.msra.mxu0 %v958
    %982 = vmatprep.subr.bf16.mxu0 0
    %983 = vmatpush1.bf16.msra.mxu0 %v959
    %984 = vmatprep.subr.bf16.mxu0 0
    %985 = vmatpush1.bf16.msra.mxu0 0
    %986 = vmatprep.subr.bf16.mxu0 0
    %987 = vmatpush1.bf16.msra.mxu0 0
    %988 = vmatprep.subr.bf16.mxu0 0
    %989 = vmatpush1.bf16.msra.mxu0 0
    %990 = vmatprep.subr.bf16.mxu0 0
    %991 = vmatpush1.bf16.msra.mxu0 0
    %992 = vmatprep.subr.bf16.mxu0 0
    %993 = vmatpush1.bf16.msra.mxu0 0
    %994 = vmatprep.subr.bf16.mxu0 0
    %995 = vmatpush1.bf16.msra.mxu0 0
    %996 = vmatprep.subr.bf16.mxu0 0
    %997 = vmatpush1.bf16.msra.mxu0 0
    %998 = vmatprep.subr.bf16.mxu0 0
    %999 = vmatpush1.bf16.msra.mxu0 0
    %1000 = vmatprep.mubr.bf16.mxu0 0
    %1001 = vmatmul.mubr.bf16.gmra.mrb[0].mxu0 %v896
    %v1002 = vpop.f32.mrb[0].mxu0
    %v1003 = vadd.f32 %v918, %v1002
    %v1004 = vpop.f32.mrb[0].mxu0
    %v1005 = vpop.f32.mrb[0].mxu0
    %v1006 = vpop.f32.mrb[0].mxu0
    %1007 = vdwg.mxu0
    %v1008 = vpack.c.bf16 %v1003, %v1003
    %v1011 = vunpack.c.l.s4 1966171168
    %v1012 = vunpack.c.0.s8 %v1011
    %v1013 = vlaneseq
    %v1014 = vshrl.u32 %v1013, 7
    %v1015 = vsub.s32 %v1012, %v1014
    %v1016 = vrot.slane %v1008, %v1015
    %v1017 = vcombine.high %v1016, %v1016
    %v1019 = vunpack.c.l.s4 1966171168
    %v1020 = vunpack.c.0.s8 %v1019
    %v1021 = vlaneseq
    %v1022 = vshrl.u32 %v1021, 7
    %v1023 = vsub.s32 %v1020, %v1022
    %v1024 = vrot.slane %v1016, %v1023
    %v1026 = vunpack.c.l.s4 1966171168
    %v1027 = vunpack.c.0.s8 %v1026
    %v1028 = vlaneseq
    %v1029 = vshrl.u32 %v1028, 7
    %v1030 = vsub.s32 %v1027, %v1029
    %v1031 = vrot.slane %v1017, %v1030
    %v1032 = vcombine.high %v1024, %v1024
    %v1033 = vcombine.high %v1031, %v1031
    %1038 = vst [vmem:[#allocation3] sm:$0x1] %v1024
    %1039 = vst [vmem:[#allocation3 + $0x1] sm:$0x1] %v1031
    %1040 = vst [vmem:[#allocation3 + $0x2] sm:$0x1] %v1032
    %1041 = vst [vmem:[#allocation3 + $0x3] sm:$0x1] %v1033
    // Predicated region
    $region75: #{forward.1} parent=1 // pred_check
      _
    $region76: #{forward.1} parent=1 // pred_check_branch
      %1043 = sbr.rel (0) target = $region78
    $region77: #{forward.1} parent=1 // pred_region
      // Predicated region
      $region79: #{forward.1} parent=77 // pred_check
        _
      $region80: #{forward.1} parent=77 // pred_check_branch
        %1045 = sbr.rel (0) target = $region82
      $region81: #{forward.1} parent=77 // pred_region
        // Predicated region
        $region83: #{forward.1} parent=81 // pred_check
          _
        $region84: #{forward.1} parent=81 // pred_check_branch
          %1047 = sbr.rel target = $region86
        $region85: #{forward.1} parent=81 // pred_region
          // Predicated region
          $region98: #{forward.1} parent=85 // pred_check
            _
          $region99: #{forward.1} parent=85 // pred_check_branch
            %1062 = sbr.rel (0) target = $region101
          $region100: #{forward.1} parent=85 // pred_region
            loop: start=0, step=1, limit=1
            $region102: #{forward.1} parent=100 // loop_pre_header
              _
            $region103: #{forward.1} parent=100 // loop_header
              %s1065 = sphi 0, %s1069
              %p1066 = scmp.ge.s32.totalorder %s1065, 1
              %s1070 = sphi [#allocation3], [#allocation3]
              %s1071 = sphi %s8, %s8
            $region104: #{forward.1} parent=100 // loop_header_branch
              %1068 = sbr.rel (%p1066) target = $region108
            $region105: #{forward.1} parent=100 // loop_body
              %v1072 = vld [vmem:[%s1070] sm:$0x1]
              %1073 = vst [vmem:[%s1071] sm:$0x1] %v1072
            $region106: #{forward.1} parent=100 // loop_footer
              %s1069 = sadd.s32 1, %s1065
            $region107: #{forward.1} parent=100 // loop_footer_branch
              %1064 = sbr.rel target = $region103
            $region108: #{forward.1} parent=100 // loop_exit
              _
          $region101: #{forward.1} parent=85 // pred_fallthru
            _
        $region86: #{forward.1} parent=81 // pred_fallthru
          _
        // Predicated region
        $region87: #{forward.1} parent=81 // pred_check
          _
        $region88: #{forward.1} parent=81 // pred_check_branch
          %1049 = sbr.rel (0) target = $region90
        $region89: #{forward.1} parent=81 // pred_region
          loop: start=0, step=1, limit=1
          $region91: #{forward.1} parent=89 // loop_pre_header
            _
          $region92: #{forward.1} parent=89 // loop_header
            %s1052 = sphi 0, %s1056
            %p1053 = scmp.ge.s32.totalorder %s1052, 1
            %s1057 = sphi [#allocation3], [#allocation3]
            %s1058 = sphi %s8, %s8
          $region93: #{forward.1} parent=89 // loop_header_branch
            %1055 = sbr.rel (%p1053) target = $region97
          $region94: #{forward.1} parent=89 // loop_body
            %v1059 = vld [vmem:[%s1057] sm:$0x1]
            %1060 = vst [vmem:[%s1058] sm:$0x1] %v1059
          $region95: #{forward.1} parent=89 // loop_footer
            %s1056 = sadd.s32 1, %s1052
          $region96: #{forward.1} parent=89 // loop_footer_branch
            %1051 = sbr.rel target = $region92
          $region97: #{forward.1} parent=89 // loop_exit
            _
        $region90: #{forward.1} parent=81 // pred_fallthru
          _
      $region82: #{forward.1} parent=77 // pred_fallthru
        _
      %1074 = vnop
    $region78: #{forward.1} parent=1 // pred_fallthru
      _
    // Predicated region
    $region109: #{forward.1} parent=1 // pred_check
      _
    $region110: #{forward.1} parent=1 // pred_check_branch
      %1076 = sbr.rel (0) target = $region112
    $region111: #{forward.1} parent=1 // pred_region
      _
    $region112: #{forward.1} parent=1 // pred_fallthru
      _

</llo_original>
